<compile_context>
chip_gen: v7x
topology: tpu7x:2x2x1
jax: 0.10.0
libtpu: 0.0.40
codegen_flags: <defaults>
</compile_context>

<pallas_src>
import jax
import jax.numpy as jnp
from jax import lax
from jax.experimental import pallas as pl
from jax.experimental.pallas import tpu as pltpu

# ----- Loihi neuron parameters (typical slayerLoihi configuration) -----------
I_DECAY = 1024            # current decay mantissa
V_DECAY = 128             # voltage decay mantissa
VTH_MANT = 80             # threshold mantissa
W_SCALE = 64.0            # 2**(6 + wgtExp), wgtExp = 0 (applied inside the kernel)
THETA = VTH_MANT * 64.0   # spiking threshold
I_ALPHA = (4096 - I_DECAY) / 4096.0
V_ALPHA = (4096 - V_DECAY) / 4096.0

NB = 8                    # batch elements packed per sublane tile


def dense_loihi_kernel(x_ref, w_ref, out_ref, ws_ref, cur_ref, volt_ref, prev_ref):
    """Fused dense-synapse + Loihi neuron + delayShift(1) kernel.

    Grid = (batch_groups, cout_tiles, time_blocks); group/cout axes squeezed/tile.

    x_ref    : (tblk, 8, Cin)        f32 input spikes (8 batch elems per sublane)
    w_ref    : (Cin, Cout_tile)      f32 quantized weights (W_SCALE applied here)
    out_ref  : (tblk, 8, Cout_tile)  f32 output spikes (already delay-shifted by 1)
    ws_ref   : (tblk, 8, Cout_tile)  f32 VMEM scratch (batched synaptic input)
    cur_ref, volt_ref, prev_ref : (8, Cout_tile) f32 state carried across time blocks
    """
    tblk, nb, cin = x_ref.shape
    cout_t = w_ref.shape[1]

    # State persists across the innermost ("arbitrary") time axis; reset it at the
    # first time block of every (batch-group, Cout-tile) pair.
    @pl.when(pl.program_id(2) == 0)
    def _init():
        cur_ref[...] = jnp.zeros_like(cur_ref)
        volt_ref[...] = jnp.zeros_like(volt_ref)
        prev_ref[...] = jnp.zeros_like(prev_ref)

    # One MXU matmul for the whole (time block x batch pack); the (tblk, 8, Cin)
    # -> (tblk*8, Cin) reshape is tile-aligned (sublane dim is exactly 8).
    xs = x_ref[...].reshape(tblk * nb, cin)
    ws = jnp.dot(xs, w_ref[...], preferred_element_type=jnp.float32) * W_SCALE
    ws_ref[...] = ws.reshape(tblk, nb, cout_t)

    # Register-carried state; branch-free delayShift(1): step t writes the spike
    # generated at t-1 (held in the carry) to out[t].
    def step(t, carry):
        cur, volt, prev = carry
        out_ref[t] = prev.astype(out_ref.dtype)
        cur = cur * I_ALPHA + ws_ref[t]
        volt = volt * V_ALPHA + cur
        spk = (volt >= THETA).astype(jnp.float32)
        volt = jnp.where(spk > 0.0, 0.0, volt)          # hard reset on spike
        return cur, volt, spk

    unroll = min(tblk, 8 if cout_t <= 256 else 4)       # cap to avoid vreg spills
    cur, volt, prev = lax.fori_loop(
        0, tblk, step,
        (cur_ref[...], volt_ref[...], prev_ref[...]),
        unroll=unroll)

    # Cross-time-block carry written back to VMEM once per block.
    cur_ref[...] = cur
    volt_ref[...] = volt
    prev_ref[...] = prev


def dense_block_forward(spike_nchwt, weight, *, tblk=256):
    """denseBlock.forward. spike_nchwt: (N, Cin, 1, 1, T); weight: (Cout, Cin)."""
    N, Cin, H, Wd, T = spike_nchwt.shape
    assert H == 1 and Wd == 1, "dense layer expects H = W = 1"
    Cout = weight.shape[0]

    # Batch packing: pad N to a multiple of 8. The recurrence cost is identical for
    # 1..8 real elements per group (the vreg is (8,128) either way); only the MXU
    # matmul sees the padding, and it has ample headroom.
    ngroups = pl.cdiv(N, NB)
    n_pad = ngroups * NB

    # Lane-dense output / state: pad Cout to a multiple of 128.
    cout_pad = pl.cdiv(Cout, 128) * 128
    cout_tile = 128
    for cand in (512, 384, 256, 128):
        if cand <= cout_pad and cout_pad % cand == 0:
            cout_tile = cand
            break
    n_ct = cout_pad // cout_tile

    # Time block: large (amortizes per-grid-step overhead) but VMEM-budgeted so it
    # also fits v7x's 64 MiB; don't over-pad tiny T.
    tblk = min(tblk, max(8, pl.cdiv(T, 8) * 8))

    def vmem_bytes(tb):
        return 4 * (2 * tb * NB * Cin            # x, double-buffered
                    + 2 * tb * NB * cout_tile    # out, double-buffered
                    + 2 * Cin * cout_tile        # W, double-buffered
                    + tb * NB * cout_tile        # ws scratch
                    + 3 * NB * cout_tile)        # neuron state
    while tblk > 8 and vmem_bytes(tblk) > 48 * 1024 * 1024:
        tblk = max(8, tblk // 2)
    t_pad = pl.cdiv(T, tblk) * tblk
    n_tb = t_pad // tblk

    # Layout: (ngroups, t_pad, 8, Cin) — batch packed into the sublane dim, channels
    # in lanes. TODO(synk): this transpose is an extra HBM round trip; in a full
    # network the upstream layer should emit the time-major packed layout directly.
    x = spike_nchwt.reshape(N, Cin, T).astype(jnp.float32)
    x = jnp.transpose(x, (2, 0, 1))                              # (T, N, Cin)
    x = jnp.pad(x, ((0, t_pad - T), (0, n_pad - N), (0, 0)))
    x = x.reshape(t_pad, ngroups, NB, Cin).transpose(1, 0, 2, 3)  # (g, t, 8, Cin)

    # Quantized weights are small even integers, so every matmul pass is exact;
    # the x64 Loihi weight scale (a power of two) is applied inside the kernel.
    w = jnp.transpose(weight.astype(jnp.float32))                # (Cin, Cout)
    w = jnp.pad(w, ((0, 0), (0, cout_pad - Cout)))

    out = pl.pallas_call(
        dense_loihi_kernel,
        out_shape=jax.ShapeDtypeStruct((ngroups, t_pad, NB, cout_pad), jnp.float32),
        grid=(ngroups, n_ct, n_tb),
        in_specs=[
            pl.BlockSpec((None, tblk, NB, Cin), lambda g, c, tb: (g, tb, 0, 0)),
            pl.BlockSpec((Cin, cout_tile), lambda g, c, tb: (0, c)),
        ],
        out_specs=pl.BlockSpec((None, tblk, NB, cout_tile),
                               lambda g, c, tb: (g, tb, 0, c)),
        scratch_shapes=[
            pltpu.VMEM((tblk, NB, cout_tile), jnp.float32),   # ws (synaptic input)
            pltpu.VMEM((NB, cout_tile), jnp.float32),         # current
            pltpu.VMEM((NB, cout_tile), jnp.float32),         # voltage
            pltpu.VMEM((NB, cout_tile), jnp.float32),         # delayShift carry
        ],
        compiler_params=pltpu.CompilerParams(
            dimension_semantics=("parallel", "parallel", "arbitrary"),
            vmem_limit_bytes=int(min(128 * 1024 * 1024,
                                     max(32 * 1024 * 1024, 2 * vmem_bytes(tblk)))),
        ),
    )(x, w)

    # (ngroups, t_pad, 8, cout_pad) -> PyTorch NCHWT (N, Cout, 1, 1, T), float32.
    out = out.transpose(1, 0, 2, 3).reshape(t_pad, n_pad, cout_pad)
    out = out[:T, :N, :Cout]                                     # drop all padding
    return jnp.transpose(out, (1, 2, 0)).reshape(N, Cout, 1, 1, T)


def dense_block_reference(spike_nchwt, weight):
    """Pure-JAX reference of denseBlock.forward (same float approximation)."""
    N, Cin, _, _, T = spike_nchwt.shape
    Cout = weight.shape[0]
    x = spike_nchwt.reshape(N, Cin, T).astype(jnp.float32)
    ws = jnp.einsum('oc,nct->not', weight.astype(jnp.float32), x,
                    precision=lax.Precision.HIGHEST)             # (N, Cout, T)
    cur = jnp.zeros((N, Cout), jnp.float32)
    volt = jnp.zeros((N, Cout), jnp.float32)
    spikes = []
    for t in range(T):
        cur = cur * I_ALPHA + W_SCALE * ws[..., t]
        volt = volt * V_ALPHA + cur
        spk = (volt >= THETA).astype(jnp.float32)
        volt = jnp.where(spk > 0.0, 0.0, volt)
        spikes.append(spk)
    spikes = jnp.stack(spikes, axis=-1)                          # (N, Cout, T)
    shifted = jnp.concatenate(
        [jnp.zeros((N, Cout, 1), jnp.float32), spikes[..., :-1]], axis=-1)
    return shifted.reshape(N, Cout, 1, 1, T)


def init_dense_weight(key, in_features, out_features,
                      weight_scale=100.0, quant_step=2.0):
    """Emulates slayer.dense weight init (uniform conv init * weightScale)
    followed by preHookFx = utils.quantize(x, step=2)."""
    k = 1.0 / jnp.sqrt(jnp.float32(in_features))
    w = jax.random.uniform(key, (out_features, in_features), jnp.float32, -k, k)
    w = w * weight_scale
    w = quant_step * jnp.round(w / quant_step)    # quantize to multiples of 2
    return w


if __name__ == "__main__":
    key = jax.random.PRNGKey(0)
    k_w, k_s = jax.random.split(key)

    N, Cin, Cout, T = 2, 32, 16, 8                # small synthetic shapes
    weight = init_dense_weight(k_w, Cin, Cout)    # (Cout, Cin)
    # binary input spike train in slayer NCHWT layout: (N, Cin, 1, 1, T)
    spike_in = (jax.random.uniform(k_s, (N, Cin, 1, 1, T)) < 0.3).astype(jnp.float32)

    out = jax.block_until_ready(dense_block_forward(spike_in, weight))
    ref = jax.block_until_ready(dense_block_reference(spike_in, weight))

    assert out.shape == (N, Cout, 1, 1, T)
    assert bool(jnp.all((out == 0.0) | (out == 1.0)))   # binary spikes
    assert bool(jnp.all(out[..., 0] == 0.0))            # delayShift(1): t=0 is zero
    assert bool(jnp.array_equal(out, ref)), "kernel does not match JAX reference"
    print("KERNEL_OK")
</pallas_src>

<mosaic_0001>
module attributes {stable_mosaic.version = 11 : i64} {
  func.func @dense_loihi_kernel(%arg0: i32, %arg1: i32, %arg2: i32, %arg3: memref<1x8x8x32xf32, #tpu.memory_space<vmem>>, %arg4: memref<32x128xf32, #tpu.memory_space<vmem>>, %arg5: memref<1x8x8x128xf32, #tpu.memory_space<vmem>>, %arg6: memref<8x8x128xf32, #tpu.memory_space<vmem>>, %arg7: memref<8x128xf32, #tpu.memory_space<vmem>>, %arg8: memref<8x128xf32, #tpu.memory_space<vmem>>, %arg9: memref<8x128xf32, #tpu.memory_space<vmem>>) attributes {dimension_semantics = [#tpu.dimension_semantics<parallel>, #tpu.dimension_semantics<parallel>, #tpu.dimension_semantics<arbitrary>], iteration_bounds = array<i64: 1, 1, 1>, scalar_prefetch = 0 : i64, scratch_operands = 4 : i64, tpu.core_type = #tpu.core_type<tc>, window_params = [{transform_indices = @transform_0, window_bounds = array<i64: 1, 8, 8, 32>}, {transform_indices = @transform_1, window_bounds = array<i64: 32, 128>}, {transform_indices = @transform_2, window_bounds = array<i64: 1, 8, 8, 128>}]} {
    %c0_i32 = arith.constant 0 : i32
    %0 = arith.cmpi eq, %arg2, %c0_i32 : i32
    %1 = arith.extui %0 : i1 to i32
    %c0_i32_0 = arith.constant 0 : i32
    %2 = arith.cmpi ne, %1, %c0_i32_0 : i32
    scf.if %2 {
      %cst_103 = arith.constant 0.000000e+00 : f32
      %186 = vector.broadcast %cst_103 : f32 to vector<8x128xf32>
      %c0_104 = arith.constant 0 : index
      %c0_105 = arith.constant 0 : index
      %187 = vector.load %arg7[%c0_104, %c0_105] : memref<8x128xf32, #tpu.memory_space<vmem>>, vector<8x128xf32>
      tpu.vector_store %arg7[%c0_104, %c0_105], %186 {strides = array<i32>} : memref<8x128xf32, #tpu.memory_space<vmem>>, vector<8x128xf32>,
      %cst_106 = arith.constant 0.000000e+00 : f32
      %188 = vector.broadcast %cst_106 : f32 to vector<8x128xf32>
      %c0_107 = arith.constant 0 : index
      %c0_108 = arith.constant 0 : index
      %189 = vector.load %arg8[%c0_107, %c0_108] : memref<8x128xf32, #tpu.memory_space<vmem>>, vector<8x128xf32>
      tpu.vector_store %arg8[%c0_107, %c0_108], %188 {strides = array<i32>} : memref<8x128xf32, #tpu.memory_space<vmem>>, vector<8x128xf32>,
      %cst_109 = arith.constant 0.000000e+00 : f32
      %190 = vector.broadcast %cst_109 : f32 to vector<8x128xf32>
      %c0_110 = arith.constant 0 : index
      %c0_111 = arith.constant 0 : index
      %191 = vector.load %arg9[%c0_110, %c0_111] : memref<8x128xf32, #tpu.memory_space<vmem>>, vector<8x128xf32>
      tpu.vector_store %arg9[%c0_110, %c0_111], %190 {strides = array<i32>} : memref<8x128xf32, #tpu.memory_space<vmem>>, vector<8x128xf32>,
    } else {
    }
    %c0 = arith.constant 0 : index
    %c0_1 = arith.constant 0 : index
    %c0_2 = arith.constant 0 : index
    %c0_3 = arith.constant 0 : index
    %3 = vector.load %arg3[%c0, %c0_1, %c0_2, %c0_3] : memref<1x8x8x32xf32, #tpu.memory_space<vmem>>, vector<1x8x8x32xf32>
    %4 = vector.shape_cast %3 : vector<1x8x8x32xf32> to vector<8x8x32xf32>
    %5 = vector.shape_cast %4 : vector<8x8x32xf32> to vector<64x32xf32>
    %c0_4 = arith.constant 0 : index
    %c0_5 = arith.constant 0 : index
    %6 = vector.load %arg4[%c0_4, %c0_5] : memref<32x128xf32, #tpu.memory_space<vmem>>, vector<32x128xf32>
    %cst = arith.constant dense<0.000000e+00> : vector<64x128xf32>
    %7 = tpu.matmul %5, %6, %cst {dimension_numbers = #tpu.dot_dimension_numbers<[1], [0], [0], [1], [0, 0, 1, 1], [], []>} : vector<64x32xf32>, vector<32x128xf32>, vector<64x128xf32> -> vector<64x128xf32>
    %cst_6 = arith.constant 6.400000e+01 : f32
    %8 = vector.broadcast %cst_6 : f32 to vector<64x128xf32>
    %9 = arith.mulf %7, %8 : vector<64x128xf32>
    %10 = vector.shape_cast %9 : vector<64x128xf32> to vector<8x8x128xf32>
    %c0_7 = arith.constant 0 : index
    %c0_8 = arith.constant 0 : index
    %c0_9 = arith.constant 0 : index
    %11 = vector.load %arg6[%c0_7, %c0_8, %c0_9] : memref<8x8x128xf32, #tpu.memory_space<vmem>>, vector<8x8x128xf32>
    tpu.vector_store %arg6[%c0_7, %c0_8, %c0_9], %10 {strides = array<i32>} : memref<8x8x128xf32, #tpu.memory_space<vmem>>, vector<8x8x128xf32>,
    %c0_10 = arith.constant 0 : index
    %c0_11 = arith.constant 0 : index
    %12 = vector.load %arg7[%c0_10, %c0_11] : memref<8x128xf32, #tpu.memory_space<vmem>>, vector<8x128xf32>
    %c0_12 = arith.constant 0 : index
    %c0_13 = arith.constant 0 : index
    %13 = vector.load %arg8[%c0_12, %c0_13] : memref<8x128xf32, #tpu.memory_space<vmem>>, vector<8x128xf32>
    %c0_14 = arith.constant 0 : index
    %c0_15 = arith.constant 0 : index
    %14 = vector.load %arg9[%c0_14, %c0_15] : memref<8x128xf32, #tpu.memory_space<vmem>>, vector<8x128xf32>
    %c0_i32_16 = arith.constant 0 : i32
    %c0_17 = arith.constant 0 : index
    %15 = arith.index_cast %c0_i32_16 : i32 to index
    %c0_18 = arith.constant 0 : index
    %c0_19 = arith.constant 0 : index
    %16 = vector.load %arg5[%c0_17, %15, %c0_18, %c0_19] : memref<1x8x8x128xf32, #tpu.memory_space<vmem>>, vector<1x1x8x128xf32>
    %17 = vector.shape_cast %16 : vector<1x1x8x128xf32> to vector<8x128xf32>
    %18 = vector.shape_cast %14 : vector<8x128xf32> to vector<1x1x8x128xf32>
    tpu.vector_store %arg5[%c0_17, %15, %c0_18, %c0_19], %18 {strides = array<i32>} : memref<1x8x8x128xf32, #tpu.memory_space<vmem>>, vector<1x1x8x128xf32>,
    %cst_20 = arith.constant 7.500000e-01 : f32
    %19 = vector.broadcast %cst_20 : f32 to vector<8x128xf32>
    %20 = arith.mulf %12, %19 : vector<8x128xf32>
    %21 = arith.index_cast %c0_i32_16 : i32 to index
    %c0_21 = arith.constant 0 : index
    %c0_22 = arith.constant 0 : index
    %22 = vector.load %arg6[%21, %c0_21, %c0_22] : memref<8x8x128xf32, #tpu.memory_space<vmem>>, vector<1x8x128xf32>
    %23 = vector.shape_cast %22 : vector<1x8x128xf32> to vector<8x128xf32>
    %24 = arith.addf %20, %23 : vector<8x128xf32>
    %cst_23 = arith.constant 9.687500e-01 : f32
    %25 = vector.broadcast %cst_23 : f32 to vector<8x128xf32>
    %26 = arith.mulf %13, %25 : vector<8x128xf32>
    %27 = arith.addf %26, %24 : vector<8x128xf32>
    %cst_24 = arith.constant 5.120000e+03 : f32
    %28 = vector.broadcast %cst_24 : f32 to vector<8x128xf32>
    %29 = arith.cmpf oge, %27, %28 : vector<8x128xf32>
    %30 = arith.extui %29 : vector<8x128xi1> to vector<8x128xi32>
    %31 = arith.sitofp %30 : vector<8x128xi32> to vector<8x128xf32>
    %cst_25 = arith.constant 0.000000e+00 : f32
    %32 = vector.broadcast %cst_25 : f32 to vector<8x128xf32>
    %33 = arith.cmpf ogt, %31, %32 : vector<8x128xf32>
    %cst_26 = arith.constant 0.000000e+00 : f32
    %34 = vector.broadcast %cst_26 : f32 to vector<8x128xf32>
    %35 = arith.select %33, %34, %27 : vector<8x128xi1>, vector<8x128xf32>
    %c1_i32 = arith.constant 1 : i32
    %c0_27 = arith.constant 0 : index
    %36 = arith.index_cast %c1_i32 : i32 to index
    %c0_28 = arith.constant 0 : index
    %c0_29 = arith.constant 0 : index
    %37 = vector.load %arg5[%c0_27, %36, %c0_28, %c0_29] : memref<1x8x8x128xf32, #tpu.memory_space<vmem>>, vector<1x1x8x128xf32>
    %38 = vector.shape_cast %37 : vector<1x1x8x128xf32> to vector<8x128xf32>
    %39 = vector.shape_cast %31 : vector<8x128xf32> to vector<1x1x8x128xf32>
    tpu.vector_store %arg5[%c0_27, %36, %c0_28, %c0_29], %39 {strides = array<i32>} : memref<1x8x8x128xf32, #tpu.memory_space<vmem>>, vector<1x1x8x128xf32>,
    %cst_30 = arith.constant 7.500000e-01 : f32
    %40 = vector.broadcast %cst_30 : f32 to vector<8x128xf32>
    %41 = arith.mulf %24, %40 : vector<8x128xf32>
    %42 = arith.index_cast %c1_i32 : i32 to index
    %c0_31 = arith.constant 0 : index
    %c0_32 = arith.constant 0 : index
    %43 = vector.load %arg6[%42, %c0_31, %c0_32] : memref<8x8x128xf32, #tpu.memory_space<vmem>>, vector<1x8x128xf32>
    %44 = vector.shape_cast %43 : vector<1x8x128xf32> to vector<8x128xf32>
    %45 = arith.addf %41, %44 : vector<8x128xf32>
    %cst_33 = arith.constant 9.687500e-01 : f32
    %46 = vector.broadcast %cst_33 : f32 to vector<8x128xf32>
    %47 = arith.mulf %35, %46 : vector<8x128xf32>
    %48 = arith.addf %47, %45 : vector<8x128xf32>
    %cst_34 = arith.constant 5.120000e+03 : f32
    %49 = vector.broadcast %cst_34 : f32 to vector<8x128xf32>
    %50 = arith.cmpf oge, %48, %49 : vector<8x128xf32>
    %51 = arith.extui %50 : vector<8x128xi1> to vector<8x128xi32>
    %52 = arith.sitofp %51 : vector<8x128xi32> to vector<8x128xf32>
    %cst_35 = arith.constant 0.000000e+00 : f32
    %53 = vector.broadcast %cst_35 : f32 to vector<8x128xf32>
    %54 = arith.cmpf ogt, %52, %53 : vector<8x128xf32>
    %cst_36 = arith.constant 0.000000e+00 : f32
    %55 = vector.broadcast %cst_36 : f32 to vector<8x128xf32>
    %56 = arith.select %54, %55, %48 : vector<8x128xi1>, vector<8x128xf32>
    %c2_i32 = arith.constant 2 : i32
    %c0_37 = arith.constant 0 : index
    %57 = arith.index_cast %c2_i32 : i32 to index
    %c0_38 = arith.constant 0 : index
    %c0_39 = arith.constant 0 : index
    %58 = vector.load %arg5[%c0_37, %57, %c0_38, %c0_39] : memref<1x8x8x128xf32, #tpu.memory_space<vmem>>, vector<1x1x8x128xf32>
    %59 = vector.shape_cast %58 : vector<1x1x8x128xf32> to vector<8x128xf32>
    %60 = vector.shape_cast %52 : vector<8x128xf32> to vector<1x1x8x128xf32>
    tpu.vector_store %arg5[%c0_37, %57, %c0_38, %c0_39], %60 {strides = array<i32>} : memref<1x8x8x128xf32, #tpu.memory_space<vmem>>, vector<1x1x8x128xf32>,
    %cst_40 = arith.constant 7.500000e-01 : f32
    %61 = vector.broadcast %cst_40 : f32 to vector<8x128xf32>
    %62 = arith.mulf %45, %61 : vector<8x128xf32>
    %63 = arith.index_cast %c2_i32 : i32 to index
    %c0_41 = arith.constant 0 : index
    %c0_42 = arith.constant 0 : index
    %64 = vector.load %arg6[%63, %c0_41, %c0_42] : memref<8x8x128xf32, #tpu.memory_space<vmem>>, vector<1x8x128xf32>
    %65 = vector.shape_cast %64 : vector<1x8x128xf32> to vector<8x128xf32>
    %66 = arith.addf %62, %65 : vector<8x128xf32>
    %cst_43 = arith.constant 9.687500e-01 : f32
    %67 = vector.broadcast %cst_43 : f32 to vector<8x128xf32>
    %68 = arith.mulf %56, %67 : vector<8x128xf32>
    %69 = arith.addf %68, %66 : vector<8x128xf32>
    %cst_44 = arith.constant 5.120000e+03 : f32
    %70 = vector.broadcast %cst_44 : f32 to vector<8x128xf32>
    %71 = arith.cmpf oge, %69, %70 : vector<8x128xf32>
    %72 = arith.extui %71 : vector<8x128xi1> to vector<8x128xi32>
    %73 = arith.sitofp %72 : vector<8x128xi32> to vector<8x128xf32>
    %cst_45 = arith.constant 0.000000e+00 : f32
    %74 = vector.broadcast %cst_45 : f32 to vector<8x128xf32>
    %75 = arith.cmpf ogt, %73, %74 : vector<8x128xf32>
    %cst_46 = arith.constant 0.000000e+00 : f32
    %76 = vector.broadcast %cst_46 : f32 to vector<8x128xf32>
    %77 = arith.select %75, %76, %69 : vector<8x128xi1>, vector<8x128xf32>
    %c3_i32 = arith.constant 3 : i32
    %c0_47 = arith.constant 0 : index
    %78 = arith.index_cast %c3_i32 : i32 to index
    %c0_48 = arith.constant 0 : index
    %c0_49 = arith.constant 0 : index
    %79 = vector.load %arg5[%c0_47, %78, %c0_48, %c0_49] : memref<1x8x8x128xf32, #tpu.memory_space<vmem>>, vector<1x1x8x128xf32>
    %80 = vector.shape_cast %79 : vector<1x1x8x128xf32> to vector<8x128xf32>
    %81 = vector.shape_cast %73 : vector<8x128xf32> to vector<1x1x8x128xf32>
    tpu.vector_store %arg5[%c0_47, %78, %c0_48, %c0_49], %81 {strides = array<i32>} : memref<1x8x8x128xf32, #tpu.memory_space<vmem>>, vector<1x1x8x128xf32>,
    %cst_50 = arith.constant 7.500000e-01 : f32
    %82 = vector.broadcast %cst_50 : f32 to vector<8x128xf32>
    %83 = arith.mulf %66, %82 : vector<8x128xf32>
    %84 = arith.index_cast %c3_i32 : i32 to index
    %c0_51 = arith.constant 0 : index
    %c0_52 = arith.constant 0 : index
    %85 = vector.load %arg6[%84, %c0_51, %c0_52] : memref<8x8x128xf32, #tpu.memory_space<vmem>>, vector<1x8x128xf32>
    %86 = vector.shape_cast %85 : vector<1x8x128xf32> to vector<8x128xf32>
    %87 = arith.addf %83, %86 : vector<8x128xf32>
    %cst_53 = arith.constant 9.687500e-01 : f32
    %88 = vector.broadcast %cst_53 : f32 to vector<8x128xf32>
    %89 = arith.mulf %77, %88 : vector<8x128xf32>
    %90 = arith.addf %89, %87 : vector<8x128xf32>
    %cst_54 = arith.constant 5.120000e+03 : f32
    %91 = vector.broadcast %cst_54 : f32 to vector<8x128xf32>
    %92 = arith.cmpf oge, %90, %91 : vector<8x128xf32>
    %93 = arith.extui %92 : vector<8x128xi1> to vector<8x128xi32>
    %94 = arith.sitofp %93 : vector<8x128xi32> to vector<8x128xf32>
    %cst_55 = arith.constant 0.000000e+00 : f32
    %95 = vector.broadcast %cst_55 : f32 to vector<8x128xf32>
    %96 = arith.cmpf ogt, %94, %95 : vector<8x128xf32>
    %cst_56 = arith.constant 0.000000e+00 : f32
    %97 = vector.broadcast %cst_56 : f32 to vector<8x128xf32>
    %98 = arith.select %96, %97, %90 : vector<8x128xi1>, vector<8x128xf32>
    %c4_i32 = arith.constant 4 : i32
    %c0_57 = arith.constant 0 : index
    %99 = arith.index_cast %c4_i32 : i32 to index
    %c0_58 = arith.constant 0 : index
    %c0_59 = arith.constant 0 : index
    %100 = vector.load %arg5[%c0_57, %99, %c0_58, %c0_59] : memref<1x8x8x128xf32, #tpu.memory_space<vmem>>, vector<1x1x8x128xf32>
    %101 = vector.shape_cast %100 : vector<1x1x8x128xf32> to vector<8x128xf32>
    %102 = vector.shape_cast %94 : vector<8x128xf32> to vector<1x1x8x128xf32>
    tpu.vector_store %arg5[%c0_57, %99, %c0_58, %c0_59], %102 {strides = array<i32>} : memref<1x8x8x128xf32, #tpu.memory_space<vmem>>, vector<1x1x8x128xf32>,
    %cst_60 = arith.constant 7.500000e-01 : f32
    %103 = vector.broadcast %cst_60 : f32 to vector<8x128xf32>
    %104 = arith.mulf %87, %103 : vector<8x128xf32>
    %105 = arith.index_cast %c4_i32 : i32 to index
    %c0_61 = arith.constant 0 : index
    %c0_62 = arith.constant 0 : index
    %106 = vector.load %arg6[%105, %c0_61, %c0_62] : memref<8x8x128xf32, #tpu.memory_space<vmem>>, vector<1x8x128xf32>
    %107 = vector.shape_cast %106 : vector<1x8x128xf32> to vector<8x128xf32>
    %108 = arith.addf %104, %107 : vector<8x128xf32>
    %cst_63 = arith.constant 9.687500e-01 : f32
    %109 = vector.broadcast %cst_63 : f32 to vector<8x128xf32>
    %110 = arith.mulf %98, %109 : vector<8x128xf32>
    %111 = arith.addf %110, %108 : vector<8x128xf32>
    %cst_64 = arith.constant 5.120000e+03 : f32
    %112 = vector.broadcast %cst_64 : f32 to vector<8x128xf32>
    %113 = arith.cmpf oge, %111, %112 : vector<8x128xf32>
    %114 = arith.extui %113 : vector<8x128xi1> to vector<8x128xi32>
    %115 = arith.sitofp %114 : vector<8x128xi32> to vector<8x128xf32>
    %cst_65 = arith.constant 0.000000e+00 : f32
    %116 = vector.broadcast %cst_65 : f32 to vector<8x128xf32>
    %117 = arith.cmpf ogt, %115, %116 : vector<8x128xf32>
    %cst_66 = arith.constant 0.000000e+00 : f32
    %118 = vector.broadcast %cst_66 : f32 to vector<8x128xf32>
    %119 = arith.select %117, %118, %111 : vector<8x128xi1>, vector<8x128xf32>
    %c5_i32 = arith.constant 5 : i32
    %c0_67 = arith.constant 0 : index
    %120 = arith.index_cast %c5_i32 : i32 to index
    %c0_68 = arith.constant 0 : index
    %c0_69 = arith.constant 0 : index
    %121 = vector.load %arg5[%c0_67, %120, %c0_68, %c0_69] : memref<1x8x8x128xf32, #tpu.memory_space<vmem>>, vector<1x1x8x128xf32>
    %122 = vector.shape_cast %121 : vector<1x1x8x128xf32> to vector<8x128xf32>
    %123 = vector.shape_cast %115 : vector<8x128xf32> to vector<1x1x8x128xf32>
    tpu.vector_store %arg5[%c0_67, %120, %c0_68, %c0_69], %123 {strides = array<i32>} : memref<1x8x8x128xf32, #tpu.memory_space<vmem>>, vector<1x1x8x128xf32>,
    %cst_70 = arith.constant 7.500000e-01 : f32
    %124 = vector.broadcast %cst_70 : f32 to vector<8x128xf32>
    %125 = arith.mulf %108, %124 : vector<8x128xf32>
    %126 = arith.index_cast %c5_i32 : i32 to index
    %c0_71 = arith.constant 0 : index
    %c0_72 = arith.constant 0 : index
    %127 = vector.load %arg6[%126, %c0_71, %c0_72] : memref<8x8x128xf32, #tpu.memory_space<vmem>>, vector<1x8x128xf32>
    %128 = vector.shape_cast %127 : vector<1x8x128xf32> to vector<8x128xf32>
    %129 = arith.addf %125, %128 : vector<8x128xf32>
    %cst_73 = arith.constant 9.687500e-01 : f32
    %130 = vector.broadcast %cst_73 : f32 to vector<8x128xf32>
    %131 = arith.mulf %119, %130 : vector<8x128xf32>
    %132 = arith.addf %131, %129 : vector<8x128xf32>
    %cst_74 = arith.constant 5.120000e+03 : f32
    %133 = vector.broadcast %cst_74 : f32 to vector<8x128xf32>
    %134 = arith.cmpf oge, %132, %133 : vector<8x128xf32>
    %135 = arith.extui %134 : vector<8x128xi1> to vector<8x128xi32>
    %136 = arith.sitofp %135 : vector<8x128xi32> to vector<8x128xf32>
    %cst_75 = arith.constant 0.000000e+00 : f32
    %137 = vector.broadcast %cst_75 : f32 to vector<8x128xf32>
    %138 = arith.cmpf ogt, %136, %137 : vector<8x128xf32>
    %cst_76 = arith.constant 0.000000e+00 : f32
    %139 = vector.broadcast %cst_76 : f32 to vector<8x128xf32>
    %140 = arith.select %138, %139, %132 : vector<8x128xi1>, vector<8x128xf32>
    %c6_i32 = arith.constant 6 : i32
    %c0_77 = arith.constant 0 : index
    %141 = arith.index_cast %c6_i32 : i32 to index
    %c0_78 = arith.constant 0 : index
    %c0_79 = arith.constant 0 : index
    %142 = vector.load %arg5[%c0_77, %141, %c0_78, %c0_79] : memref<1x8x8x128xf32, #tpu.memory_space<vmem>>, vector<1x1x8x128xf32>
    %143 = vector.shape_cast %142 : vector<1x1x8x128xf32> to vector<8x128xf32>
    %144 = vector.shape_cast %136 : vector<8x128xf32> to vector<1x1x8x128xf32>
    tpu.vector_store %arg5[%c0_77, %141, %c0_78, %c0_79], %144 {strides = array<i32>} : memref<1x8x8x128xf32, #tpu.memory_space<vmem>>, vector<1x1x8x128xf32>,
    %cst_80 = arith.constant 7.500000e-01 : f32
    %145 = vector.broadcast %cst_80 : f32 to vector<8x128xf32>
    %146 = arith.mulf %129, %145 : vector<8x128xf32>
    %147 = arith.index_cast %c6_i32 : i32 to index
    %c0_81 = arith.constant 0 : index
    %c0_82 = arith.constant 0 : index
    %148 = vector.load %arg6[%147, %c0_81, %c0_82] : memref<8x8x128xf32, #tpu.memory_space<vmem>>, vector<1x8x128xf32>
    %149 = vector.shape_cast %148 : vector<1x8x128xf32> to vector<8x128xf32>
    %150 = arith.addf %146, %149 : vector<8x128xf32>
    %cst_83 = arith.constant 9.687500e-01 : f32
    %151 = vector.broadcast %cst_83 : f32 to vector<8x128xf32>
    %152 = arith.mulf %140, %151 : vector<8x128xf32>
    %153 = arith.addf %152, %150 : vector<8x128xf32>
    %cst_84 = arith.constant 5.120000e+03 : f32
    %154 = vector.broadcast %cst_84 : f32 to vector<8x128xf32>
    %155 = arith.cmpf oge, %153, %154 : vector<8x128xf32>
    %156 = arith.extui %155 : vector<8x128xi1> to vector<8x128xi32>
    %157 = arith.sitofp %156 : vector<8x128xi32> to vector<8x128xf32>
    %cst_85 = arith.constant 0.000000e+00 : f32
    %158 = vector.broadcast %cst_85 : f32 to vector<8x128xf32>
    %159 = arith.cmpf ogt, %157, %158 : vector<8x128xf32>
    %cst_86 = arith.constant 0.000000e+00 : f32
    %160 = vector.broadcast %cst_86 : f32 to vector<8x128xf32>
    %161 = arith.select %159, %160, %153 : vector<8x128xi1>, vector<8x128xf32>
    %c7_i32 = arith.constant 7 : i32
    %c0_87 = arith.constant 0 : index
    %162 = arith.index_cast %c7_i32 : i32 to index
    %c0_88 = arith.constant 0 : index
    %c0_89 = arith.constant 0 : index
    %163 = vector.load %arg5[%c0_87, %162, %c0_88, %c0_89] : memref<1x8x8x128xf32, #tpu.memory_space<vmem>>, vector<1x1x8x128xf32>
    %164 = vector.shape_cast %163 : vector<1x1x8x128xf32> to vector<8x128xf32>
    %165 = vector.shape_cast %157 : vector<8x128xf32> to vector<1x1x8x128xf32>
    tpu.vector_store %arg5[%c0_87, %162, %c0_88, %c0_89], %165 {strides = array<i32>} : memref<1x8x8x128xf32, #tpu.memory_space<vmem>>, vector<1x1x8x128xf32>,
    %cst_90 = arith.constant 7.500000e-01 : f32
    %166 = vector.broadcast %cst_90 : f32 to vector<8x128xf32>
    %167 = arith.mulf %150, %166 : vector<8x128xf32>
    %168 = arith.index_cast %c7_i32 : i32 to index
    %c0_91 = arith.constant 0 : index
    %c0_92 = arith.constant 0 : index
    %169 = vector.load %arg6[%168, %c0_91, %c0_92] : memref<8x8x128xf32, #tpu.memory_space<vmem>>, vector<1x8x128xf32>
    %170 = vector.shape_cast %169 : vector<1x8x128xf32> to vector<8x128xf32>
    %171 = arith.addf %167, %170 : vector<8x128xf32>
    %cst_93 = arith.constant 9.687500e-01 : f32
    %172 = vector.broadcast %cst_93 : f32 to vector<8x128xf32>
    %173 = arith.mulf %161, %172 : vector<8x128xf32>
    %174 = arith.addf %173, %171 : vector<8x128xf32>
    %cst_94 = arith.constant 5.120000e+03 : f32
    %175 = vector.broadcast %cst_94 : f32 to vector<8x128xf32>
    %176 = arith.cmpf oge, %174, %175 : vector<8x128xf32>
    %177 = arith.extui %176 : vector<8x128xi1> to vector<8x128xi32>
    %178 = arith.sitofp %177 : vector<8x128xi32> to vector<8x128xf32>
    %cst_95 = arith.constant 0.000000e+00 : f32
    %179 = vector.broadcast %cst_95 : f32 to vector<8x128xf32>
    %180 = arith.cmpf ogt, %178, %179 : vector<8x128xf32>
    %cst_96 = arith.constant 0.000000e+00 : f32
    %181 = vector.broadcast %cst_96 : f32 to vector<8x128xf32>
    %182 = arith.select %180, %181, %174 : vector<8x128xi1>, vector<8x128xf32>
    %c8_i32 = arith.constant 8 : i32
    %c0_97 = arith.constant 0 : index
    %c0_98 = arith.constant 0 : index
    %183 = vector.load %arg7[%c0_97, %c0_98] : memref<8x128xf32, #tpu.memory_space<vmem>>, vector<8x128xf32>
    tpu.vector_store %arg7[%c0_97, %c0_98], %171 {strides = array<i32>} : memref<8x128xf32, #tpu.memory_space<vmem>>, vector<8x128xf32>,
    %c0_99 = arith.constant 0 : index
    %c0_100 = arith.constant 0 : index
    %184 = vector.load %arg8[%c0_99, %c0_100] : memref<8x128xf32, #tpu.memory_space<vmem>>, vector<8x128xf32>
    tpu.vector_store %arg8[%c0_99, %c0_100], %182 {strides = array<i32>} : memref<8x128xf32, #tpu.memory_space<vmem>>, vector<8x128xf32>,
    %c0_101 = arith.constant 0 : index
    %c0_102 = arith.constant 0 : index
    %185 = vector.load %arg9[%c0_101, %c0_102] : memref<8x128xf32, #tpu.memory_space<vmem>>, vector<8x128xf32>
    tpu.vector_store %arg9[%c0_101, %c0_102], %178 {strides = array<i32>} : memref<8x128xf32, #tpu.memory_space<vmem>>, vector<8x128xf32>,
    return
  }
  func.func @transform_0(%arg0: i32, %arg1: i32, %arg2: i32) -> (i32, i32, i32, i32) {
    %c0_i32 = arith.constant 0 : i32
    %c0_i32_0 = arith.constant 0 : i32
    %c0_i32_1 = arith.constant 0 : i32
    return %arg0, %arg2, %c0_i32, %c0_i32_0 : i32, i32, i32, i32
  }
  func.func @transform_1(%arg0: i32, %arg1: i32, %arg2: i32) -> (i32, i32) {
    %c0_i32 = arith.constant 0 : i32
    %c0_i32_0 = arith.constant 0 : i32
    return %c0_i32, %arg1 : i32, i32
  }
  func.func @transform_2(%arg0: i32, %arg1: i32, %arg2: i32) -> (i32, i32, i32, i32) {
    %c0_i32 = arith.constant 0 : i32
    %c0_i32_0 = arith.constant 0 : i32
    return %arg0, %arg2, %c0_i32, %arg1 : i32, i32, i32, i32
  }
}

</mosaic_0001>

<llo_original>
// kernel: tpu_custom_call.1
$region0: #{tpu_custom_call.1}
  #allocation0 [shape = 'u32[]', space=smem, size = 0x4, offset = 0x4, fixed_abs, tag = 'smem constant byte address 0x4 - core index']
  #allocation1 [shape = 'u32[144,128]{1,0:T(1,128)}', space=vmem, size = 0x12000, scoped, tag = 'internal scratch']
  #allocation2 [shape = 'f32[8,8,128]{2,1,0:T(8,128)}', space=vmem, size = 0x8000, scoped, tag = 'scratch operand']
  #allocation3 [shape = 'f32[8,128]{1,0:T(8,128)}', space=vmem, size = 0x1000, scoped, tag = 'scratch operand']
  #allocation4 [shape = 'f32[8,128]{1,0:T(8,128)}', space=vmem, size = 0x1000, scoped, tag = 'scratch operand']
  #allocation5 [shape = 'f32[8,128]{1,0:T(8,128)}', space=vmem, size = 0x1000, scoped, tag = 'scratch operand']
  %s0 = inlined_call_operand.hbm [shape: f32[1,8,8,32], index: 0, kind: input, shape index: {}]
  %s1 = inlined_call_operand.hbm [shape: f32[32,128], index: 1, kind: input, shape index: {}]
  %s2 = inlined_call_operand.hbm [shape: f32[1,8,8,128], index: 2, kind: output, shape index: {}]
  %s3 = sld [smem:[#allocation0]]
  $region30: #{tpu_custom_call.1} parent=0
    _
  %s5 = ssub.s32 1, %s3
  %s6 = scalar_select 0, %s5, %s3
  $region1: #{tpu_custom_call.1} parent=0
    #allocation6 [shape = 'u8[32768]{0}', space=vmem, size = 0x8000, scoped, tag = 'input window, operand 0, single buffered']
    #allocation7 [shape = 's32[1]{0}', space=sflag, size = 0x4, scoped, tag = 'scoped memory for tpu_custom_call.1']
    #allocation8 [shape = 's32[1]{0}', space=sflag, size = 0x4, scoped, tag = 'scoped memory for tpu_custom_call.1']
    #allocation9 [shape = 'u8[16384]{0}', space=vmem, size = 0x4000, scoped, tag = 'input window, operand 1, single buffered']
    #allocation10 [shape = 's32[1]{0}', space=sflag, size = 0x4, scoped, tag = 'scoped memory for tpu_custom_call.1']
    #allocation11 [shape = 'u8[32768]{0}', space=vmem, size = 0x8000, scoped, tag = 'output window, operand 0, single buffered']
    %7 = vsyncpa [#allocation7], 0
    %8 = vsyncpa [#allocation10], 0
    %9 = vsyncpa [#allocation8], 0
    // Predicated region
    $region2: #{tpu_custom_call.1} parent=1 // pred_check
      _
    $region3: #{tpu_custom_call.1} parent=1 // pred_check_branch
      %11 = sbr.rel (0) target = $region5
    $region4: #{tpu_custom_call.1} parent=1 // pred_region
      %s13 = ssub.s32 1024, 1024
      %14 = vsyncadd [#allocation7], %s13
      %s15 = sshll.u32 [#allocation6], 4
      %s16 = int_to_ptr.vmem [resolvable:$true] %s15
      %21 = dma.hbm_to_vmem [thread:$0]  %s0, 1024, %s16, [#allocation7], 128, 128, 8
    $region5: #{tpu_custom_call.1} parent=1 // pred_fallthru
      _
    // Predicated region
    $region6: #{tpu_custom_call.1} parent=1 // pred_check
      _
    $region7: #{tpu_custom_call.1} parent=1 // pred_check_branch
      %23 = sbr.rel (0) target = $region9
    $region8: #{tpu_custom_call.1} parent=1 // pred_region
      %s25 = ssub.s32 512, 512
      %26 = vsyncadd [#allocation10], %s25
      %s27 = sshll.u32 [#allocation9], 4
      %s28 = int_to_ptr.vmem [resolvable:$true] %s27
      %33 = dma.hbm_to_vmem [thread:$0]  %s1, 512, %s28, [#allocation10], 128, 128, 8
    $region9: #{tpu_custom_call.1} parent=1 // pred_fallthru
      _
    // Predicated region
    $region10: #{tpu_custom_call.1} parent=1 // pred_check
      _
    $region11: #{tpu_custom_call.1} parent=1 // pred_check_branch
      %35 = sbr.rel (0) target = $region13
    $region12: #{tpu_custom_call.1} parent=1 // pred_region
      %36 = dma.done [#allocation7], 1024
    $region13: #{tpu_custom_call.1} parent=1 // pred_fallthru
      _
    // Predicated region
    $region14: #{tpu_custom_call.1} parent=1 // pred_check
      _
    $region15: #{tpu_custom_call.1} parent=1 // pred_check_branch
      %38 = sbr.rel (0) target = $region17
    $region16: #{tpu_custom_call.1} parent=1 // pred_region
      %39 = dma.done [#allocation10], 512
    $region17: #{tpu_custom_call.1} parent=1 // pred_fallthru
      _
    %p40 = scmp.eq.s32.totalorder 0, 0
    // Predicated region
    $region18: #{tpu_custom_call.1} parent=1 // pred_check
      %p41 = pneg %p40
    $region19: #{tpu_custom_call.1} parent=1 // pred_check_branch
      %43 = sbr.rel (%p41) target = $region21
    $region20: #{tpu_custom_call.1} parent=1 // pred_region
      %44 = vst [vmem:[#allocation3] sm:$0xff] 0.0
      %45 = vst [vmem:[#allocation4] sm:$0xff] 0.0
      %46 = vst [vmem:[#allocation5] sm:$0xff] 0.0
    $region21: #{tpu_custom_call.1} parent=1 // pred_fallthru
      _
    %v47 = vld [vmem:[#allocation6] sm:$0xff]
    %v48 = vld [vmem:[#allocation6 + $0x8] sm:$0xff]
    %v49 = vld [vmem:[#allocation6 + $0x10] sm:$0xff]
    %v50 = vld [vmem:[#allocation6 + $0x18] sm:$0xff]
    %v51 = vld [vmem:[#allocation6 + $0x20] sm:$0xff]
    %v52 = vld [vmem:[#allocation6 + $0x28] sm:$0xff]
    %v53 = vld [vmem:[#allocation6 + $0x30] sm:$0xff]
    %v54 = vld [vmem:[#allocation6 + $0x38] sm:$0xff]
    %v55 = vld [vmem:[#allocation9] sm:$0xff]
    %v56 = vld [vmem:[#allocation9 + $0x8] sm:$0xff]
    %v57 = vld [vmem:[#allocation9 + $0x10] sm:$0xff]
    %v58 = vld [vmem:[#allocation9 + $0x18] sm:$0xff]
    %vm59 = vcmask 261120
    %v61 = vsel %vm59, %v47, 0
    %v64 = vsel %vm59, %v48, 0
    %v67 = vsel %vm59, %v49, 0
    %v70 = vsel %vm59, %v50, 0
    %v73 = vsel %vm59, %v51, 0
    %v76 = vsel %vm59, %v52, 0
    %v79 = vsel %vm59, %v53, 0
    %v82 = vsel %vm59, %v54, 0
    %84 = vmatprep.subr.mxu0 0.0
    %85 = vmatpush1.msra.mxu0 %v55
    %86 = vmatprep.subr.mxu0 0.0
    %87 = vmatpush1.msra.mxu0 %v56
    %88 = vmatprep.subr.mxu0 0.0
    %89 = vmatpush1.msra.mxu0 %v57
    %90 = vmatprep.subr.mxu0 0.0
    %91 = vmatpush1.msra.mxu0 %v58
    %92 = vmatprep.subr.mxu0 0.0
    %93 = vmatpush1.msra.mxu0 0.0
    %94 = vmatprep.subr.mxu0 0.0
    %95 = vmatpush1.msra.mxu0 0.0
    %96 = vmatprep.subr.mxu0 0.0
    %97 = vmatpush1.msra.mxu0 0.0
    %98 = vmatprep.subr.mxu0 0.0
    %99 = vmatpush1.msra.mxu0 0.0
    %100 = vmatprep.subr.mxu0 0.0
    %101 = vmatpush1.msra.mxu0 0.0
    %102 = vmatprep.subr.mxu0 0.0
    %103 = vmatpush1.msra.mxu0 0.0
    %104 = vmatprep.subr.mxu0 0.0
    %105 = vmatpush1.msra.mxu0 0.0
    %106 = vmatprep.subr.mxu0 0.0
    %107 = vmatpush1.msra.mxu0 0.0
    %108 = vmatprep.subr.mxu0 0.0
    %109 = vmatpush1.msra.mxu0 0.0
    %110 = vmatprep.subr.mxu0 0.0
    %111 = vmatpush1.msra.mxu0 0.0
    %112 = vmatprep.subr.mxu0 0.0
    %113 = vmatpush1.msra.mxu0 0.0
    %114 = vmatprep.subr.mxu0 0.0
    %115 = vmatpush1.msra.mxu0 0.0
    %116 = vmatprep.subr.mxu0 0.0
    %117 = vmatpush1.msra.mxu0 0.0
    %118 = vmatprep.subr.mxu0 0.0
    %119 = vmatpush1.msra.mxu0 0.0
    %120 = vmatprep.subr.mxu0 0.0
    %121 = vmatpush1.msra.mxu0 0.0
    %122 = vmatprep.subr.mxu0 0.0
    %123 = vmatpush1.msra.mxu0 0.0
    %124 = vmatprep.subr.mxu0 0.0
    %125 = vmatpush1.msra.mxu0 0.0
    %126 = vmatprep.subr.mxu0 0.0
    %127 = vmatpush1.msra.mxu0 0.0
    %128 = vmatprep.subr.mxu0 0.0
    %129 = vmatpush1.msra.mxu0 0.0
    %130 = vmatprep.subr.mxu0 0.0
    %131 = vmatpush1.msra.mxu0 0.0
    %132 = vmatprep.subr.mxu0 0.0
    %133 = vmatpush1.msra.mxu0 0.0
    %134 = vmatprep.subr.mxu0 0.0
    %135 = vmatpush1.msra.mxu0 0.0
    %136 = vmatprep.subr.mxu0 0.0
    %137 = vmatpush1.msra.mxu0 0.0
    %138 = vmatprep.subr.mxu0 0.0
    %139 = vmatpush1.msra.mxu0 0.0
    %140 = vmatprep.subr.mxu0 0.0
    %141 = vmatpush1.msra.mxu0 0.0
    %142 = vmatprep.subr.mxu0 0.0
    %143 = vmatpush1.msra.mxu0 0.0
    %144 = vmatprep.subr.mxu0 0.0
    %145 = vmatpush1.msra.mxu0 0.0
    %146 = vmatprep.subr.mxu0 0.0
    %147 = vmatpush1.msra.mxu0 0.0
    %148 = vmatprep.mubr.f32.mxu0 0.0
    %149 = vmatmul.mubr.f32.gmra.mrb[0].mxu0 %v61
    %v150 = vpop.f32.mrb[0].mxu0
    %v151 = vadd.f32 0.0, %v150
    %v152 = vpop.f32.mrb[0].mxu0
    %153 = vmatprep.mubr.f32.mxu0 0.0
    %154 = vmatmul.mubr.f32.gmra.mrb[0].mxu0 %v64
    %v155 = vpop.f32.mrb[0].mxu0
    %v156 = vadd.f32 0.0, %v155
    %v157 = vpop.f32.mrb[0].mxu0
    %158 = vmatprep.mubr.f32.mxu0 0.0
    %159 = vmatmul.mubr.f32.gmra.mrb[0].mxu0 %v67
    %v160 = vpop.f32.mrb[0].mxu0
    %v161 = vadd.f32 0.0, %v160
    %v162 = vpop.f32.mrb[0].mxu0
    %163 = vmatprep.mubr.f32.mxu0 0.0
    %164 = vmatmul.mubr.f32.gmra.mrb[0].mxu0 %v70
    %v165 = vpop.f32.mrb[0].mxu0
    %v166 = vadd.f32 0.0, %v165
    %v167 = vpop.f32.mrb[0].mxu0
    %168 = vmatprep.mubr.f32.mxu0 0.0
    %169 = vmatmul.mubr.f32.gmra.mrb[0].mxu0 %v73
    %v170 = vpop.f32.mrb[0].mxu0
    %v171 = vadd.f32 0.0, %v170
    %v172 = vpop.f32.mrb[0].mxu0
    %173 = vmatprep.mubr.f32.mxu0 0.0
    %174 = vmatmul.mubr.f32.gmra.mrb[0].mxu0 %v76
    %v175 = vpop.f32.mrb[0].mxu0
    %v176 = vadd.f32 0.0, %v175
    %v177 = vpop.f32.mrb[0].mxu0
    %178 = vmatprep.mubr.f32.mxu0 0.0
    %179 = vmatmul.mubr.f32.gmra.mrb[0].mxu0 %v79
    %v180 = vpop.f32.mrb[0].mxu0
    %v181 = vadd.f32 0.0, %v180
    %v182 = vpop.f32.mrb[0].mxu0
    %183 = vmatprep.mubr.f32.mxu0 0.0
    %184 = vmatmul.mubr.f32.gmra.mrb[0].mxu0 %v82
    %v185 = vpop.f32.mrb[0].mxu0
    %v186 = vadd.f32 0.0, %v185
    %v187 = vpop.f32.mrb[0].mxu0
    %188 = vdwg.mxu0
    %v189 = vmul.f32 %v151, 64.0
    %v190 = vmul.f32 %v156, 64.0
    %v191 = vmul.f32 %v161, 64.0
    %v192 = vmul.f32 %v166, 64.0
    %v193 = vmul.f32 %v171, 64.0
    %v194 = vmul.f32 %v176, 64.0
    %v195 = vmul.f32 %v181, 64.0
    %v196 = vmul.f32 %v186, 64.0
    %197 = vst [vmem:[#allocation2] sm:$0xff] %v189
    %198 = vst [vmem:[#allocation2 + $0x8] sm:$0xff] %v190
    %199 = vst [vmem:[#allocation2 + $0x10] sm:$0xff] %v191
    %200 = vst [vmem:[#allocation2 + $0x18] sm:$0xff] %v192
    %201 = vst [vmem:[#allocation2 + $0x20] sm:$0xff] %v193
    %202 = vst [vmem:[#allocation2 + $0x28] sm:$0xff] %v194
    %203 = vst [vmem:[#allocation2 + $0x30] sm:$0xff] %v195
    %204 = vst [vmem:[#allocation2 + $0x38] sm:$0xff] %v196
    %v205 = vld [vmem:[#allocation3] sm:$0xff]
    %v206 = vld [vmem:[#allocation4] sm:$0xff]
    %v207 = vld [vmem:[#allocation5] sm:$0xff]
    %208 = vst [vmem:[#allocation11] sm:$0xff] %v207
    %v209 = vmul.f32 %v205, 0.75
    %v210 = vld [vmem:[#allocation2] sm:$0xff]
    %v211 = vadd.f32 %v209, %v210
    %v212 = vmul.f32 %v206, 0.96875
    %v213 = vadd.f32 %v212, %v211
    %vm214 = vcmp.ge.f32.partialorder %v213, 5120.0
    %v215 = vsel %vm214, 1, 0
    %v216 = vcvt.s32.f32 %v215
    %vm217 = vcmp.gt.f32.partialorder %v216, 0.0
    %v218 = vsel %vm217, 0.0, %v213
    %s219 = scalar_lea.vmem [#allocation11], 8
    %220 = vst [vmem:[%s219] sm:$0xff] %v216
    %v221 = vmul.f32 %v211, 0.75
    %s222 = scalar_lea.vmem [#allocation2], 8
    %v223 = vld [vmem:[%s222] sm:$0xff]
    %v224 = vadd.f32 %v221, %v223
    %v225 = vmul.f32 %v218, 0.96875
    %v226 = vadd.f32 %v225, %v224
    %vm227 = vcmp.ge.f32.partialorder %v226, 5120.0
    %v228 = vsel %vm227, 1, 0
    %v229 = vcvt.s32.f32 %v228
    %vm230 = vcmp.gt.f32.partialorder %v229, 0.0
    %v231 = vsel %vm230, 0.0, %v226
    %s232 = scalar_lea.vmem [#allocation11], 16
    %233 = vst [vmem:[%s232] sm:$0xff] %v229
    %v234 = vmul.f32 %v224, 0.75
    %s235 = scalar_lea.vmem [#allocation2], 16
    %v236 = vld [vmem:[%s235] sm:$0xff]
    %v237 = vadd.f32 %v234, %v236
    %v238 = vmul.f32 %v231, 0.96875
    %v239 = vadd.f32 %v238, %v237
    %vm240 = vcmp.ge.f32.partialorder %v239, 5120.0
    %v241 = vsel %vm240, 1, 0
    %v242 = vcvt.s32.f32 %v241
    %vm243 = vcmp.gt.f32.partialorder %v242, 0.0
    %v244 = vsel %vm243, 0.0, %v239
    %s245 = scalar_lea.vmem [#allocation11], 24
    %246 = vst [vmem:[%s245] sm:$0xff] %v242
    %v247 = vmul.f32 %v237, 0.75
    %s248 = scalar_lea.vmem [#allocation2], 24
    %v249 = vld [vmem:[%s248] sm:$0xff]
    %v250 = vadd.f32 %v247, %v249
    %v251 = vmul.f32 %v244, 0.96875
    %v252 = vadd.f32 %v251, %v250
    %vm253 = vcmp.ge.f32.partialorder %v252, 5120.0
    %v254 = vsel %vm253, 1, 0
    %v255 = vcvt.s32.f32 %v254
    %vm256 = vcmp.gt.f32.partialorder %v255, 0.0
    %v257 = vsel %vm256, 0.0, %v252
    %s258 = scalar_lea.vmem [#allocation11], 32
    %259 = vst [vmem:[%s258] sm:$0xff] %v255
    %v260 = vmul.f32 %v250, 0.75
    %s261 = scalar_lea.vmem [#allocation2], 32
    %v262 = vld [vmem:[%s261] sm:$0xff]
    %v263 = vadd.f32 %v260, %v262
    %v264 = vmul.f32 %v257, 0.96875
    %v265 = vadd.f32 %v264, %v263
    %vm266 = vcmp.ge.f32.partialorder %v265, 5120.0
    %v267 = vsel %vm266, 1, 0
    %v268 = vcvt.s32.f32 %v267
    %vm269 = vcmp.gt.f32.partialorder %v268, 0.0
    %v270 = vsel %vm269, 0.0, %v265
    %s271 = scalar_lea.vmem [#allocation11], 40
    %272 = vst [vmem:[%s271] sm:$0xff] %v268
    %v273 = vmul.f32 %v263, 0.75
    %s274 = scalar_lea.vmem [#allocation2], 40
    %v275 = vld [vmem:[%s274] sm:$0xff]
    %v276 = vadd.f32 %v273, %v275
    %v277 = vmul.f32 %v270, 0.96875
    %v278 = vadd.f32 %v277, %v276
    %vm279 = vcmp.ge.f32.partialorder %v278, 5120.0
    %v280 = vsel %vm279, 1, 0
    %v281 = vcvt.s32.f32 %v280
    %vm282 = vcmp.gt.f32.partialorder %v281, 0.0
    %v283 = vsel %vm282, 0.0, %v278
    %s284 = scalar_lea.vmem [#allocation11], 48
    %285 = vst [vmem:[%s284] sm:$0xff] %v281
    %v286 = vmul.f32 %v276, 0.75
    %s287 = scalar_lea.vmem [#allocation2], 48
    %v288 = vld [vmem:[%s287] sm:$0xff]
    %v289 = vadd.f32 %v286, %v288
    %v290 = vmul.f32 %v283, 0.96875
    %v291 = vadd.f32 %v290, %v289
    %vm292 = vcmp.ge.f32.partialorder %v291, 5120.0
    %v293 = vsel %vm292, 1, 0
    %v294 = vcvt.s32.f32 %v293
    %vm295 = vcmp.gt.f32.partialorder %v294, 0.0
    %v296 = vsel %vm295, 0.0, %v291
    %s297 = scalar_lea.vmem [#allocation11], 56
    %298 = vst [vmem:[%s297] sm:$0xff] %v294
    %v299 = vmul.f32 %v289, 0.75
    %s300 = scalar_lea.vmem [#allocation2], 56
    %v301 = vld [vmem:[%s300] sm:$0xff]
    %v302 = vadd.f32 %v299, %v301
    %v303 = vmul.f32 %v296, 0.96875
    %v304 = vadd.f32 %v303, %v302
    %vm305 = vcmp.ge.f32.partialorder %v304, 5120.0
    %v306 = vsel %vm305, 1, 0
    %v307 = vcvt.s32.f32 %v306
    %vm308 = vcmp.gt.f32.partialorder %v307, 0.0
    %v309 = vsel %vm308, 0.0, %v304
    %310 = vst [vmem:[#allocation3] sm:$0xff] %v302
    %311 = vst [vmem:[#allocation4] sm:$0xff] %v309
    %312 = vst [vmem:[#allocation5] sm:$0xff] %v307
    // Predicated region
    $region22: #{tpu_custom_call.1} parent=1 // pred_check
      _
    $region23: #{tpu_custom_call.1} parent=1 // pred_check_branch
      %314 = sbr.rel (0) target = $region25
    $region24: #{tpu_custom_call.1} parent=1 // pred_region
      %s316 = ssub.s32 1024, 1024
      %317 = vsyncadd [#allocation8], %s316
      %s318 = sshll.u32 [#allocation11], 4
      %s319 = int_to_ptr.vmem [resolvable:$true] %s318
      %324 = dma.vmem_to_hbm [thread:$0]  %s319, 1024, %s2, [#allocation8], 128, 128, 8
    $region25: #{tpu_custom_call.1} parent=1 // pred_fallthru
      _
    // Predicated region
    $region26: #{tpu_custom_call.1} parent=1 // pred_check
      _
    $region27: #{tpu_custom_call.1} parent=1 // pred_check_branch
      %326 = sbr.rel (0) target = $region29
    $region28: #{tpu_custom_call.1} parent=1 // pred_region
      %327 = dma.done [#allocation8], 1024
    $region29: #{tpu_custom_call.1} parent=1 // pred_fallthru
      _
    %328 = vsyncpa [#allocation7], 1
    %329 = vsyncpa [#allocation10], 1
    %330 = vsyncpa [#allocation8], 1

</llo_original>
